<compile_context>
chip_gen: v7x
topology: tpu7x:2x2x1
jax: 0.10.0
libtpu: 0.0.40
codegen_flags: <defaults>
</compile_context>

<pallas_src>
import functools
import math

import jax
import jax.numpy as jnp
from jax import lax
from jax.experimental import pallas as pl
from jax.experimental.pallas import tpu as pltpu


# ---------------------------------------------------------------------------
# small helpers
# ---------------------------------------------------------------------------

def _dropout_consts(p):
    """uint32 keep-threshold and 1/(1-p) scale for integer-domain dropout."""
    thr = min(int(round(float(p) * 2.0 ** 32)), 2 ** 32 - 1)
    inv = 1.0 / (1.0 - float(p)) if p < 1.0 else 0.0
    return thr, inv


def _spec_for(arr, batched):
    """BlockSpec for a grid over the leading batch axis.

    batched=True  -> (1, rest...) block, block index (b, 0, ...).
    batched=False -> full-array block fetched once (constant block index).
    """
    n = arr.ndim
    if batched:
        return pl.BlockSpec((1,) + tuple(arr.shape[1:]),
                            lambda b, n=n: (b,) + (0,) * (n - 1))
    return pl.BlockSpec(tuple(arr.shape), lambda b, n=n: (0,) * n)


def _run_batched_kernel(kernel, args, batched_flags, out_shape):
    """pallas_call with grid over batch; per-batch (1, S, .) blocks."""
    batch = out_shape.shape[0]
    in_specs = [_spec_for(a, f) for a, f in zip(args, batched_flags)]
    n_out = len(out_shape.shape)
    out_spec = pl.BlockSpec((1,) + tuple(out_shape.shape[1:]),
                            lambda b, n=n_out: (b,) + (0,) * (n - 1))
    return pl.pallas_call(
        kernel,
        out_shape=out_shape,
        grid=(batch,),
        in_specs=in_specs,
        out_specs=out_spec,
        compiler_params=pltpu.CompilerParams(
            dimension_semantics=("parallel",)),
    )(*args)


def sinusoidal_positional_encoding(seq_len, d_model):
    """(S, D) PE tile, computed once on the host side (hoisted out of kernels)."""
    pos = jnp.arange(seq_len, dtype=jnp.float32)[:, None]            # (S, 1)
    j = jnp.arange(d_model)                                          # (D,)
    even_j = ((j // 2) * 2).astype(jnp.float32)
    denom = jnp.power(10000.0, even_j / float(d_model))
    angle = pos / denom                                              # (S, D)
    return jnp.where(j % 2 == 0, jnp.sin(angle), jnp.cos(angle)).astype(jnp.float32)


# ---------------------------------------------------------------------------
# in-kernel building blocks (traced inside pallas kernels)
# ---------------------------------------------------------------------------

def _dropout(x, bits, keep_thr, inv_keep):
    """Integer-domain dropout; compiled away entirely when keep_thr == 0."""
    if keep_thr == 0:
        return x
    keep = bits >= jnp.uint32(keep_thr)
    return jnp.where(keep, x * jnp.float32(inv_keep), 0.0)


def _layernorm(y, gamma, beta, eps):
    mean = jnp.mean(y, axis=-1, keepdims=True)
    var = jnp.mean((y - mean) ** 2, axis=-1, keepdims=True)
    return gamma * ((y - mean) * lax.rsqrt(var + eps)) + beta


def _attention_core(q, k, v, mask, scale):
    # scores = q @ k^T (contract last dims, no explicit transpose)
    s = lax.dot_general(q, k, (((1,), (1,)), ((), ())),
                        preferred_element_type=jnp.float32) * scale + mask
    s = s - jnp.max(s, axis=-1, keepdims=True)
    p = jnp.exp(s)
    p = p / jnp.sum(p, axis=-1, keepdims=True)
    return jnp.dot(p, v, preferred_element_type=jnp.float32)


def _mha_block(x, wqkv, bqkv, wo, bo, mask, num_heads, head_dim):
    """Self attention; qkv layout matches torch reshape(..., H, 3*hd)."""
    qkv = jnp.dot(x, wqkv, preferred_element_type=jnp.float32) + bqkv
    scale = 1.0 / math.sqrt(head_dim)
    outs = []
    for h in range(num_heads):                                       # [q|k|v] per head
        base = 3 * head_dim * h
        q = qkv[:, base:base + head_dim]
        k = qkv[:, base + head_dim:base + 2 * head_dim]
        v = qkv[:, base + 2 * head_dim:base + 3 * head_dim]
        outs.append(_attention_core(q, k, v, mask, scale))
    vals = jnp.concatenate(outs, axis=-1)                            # (S, D)
    return jnp.dot(vals, wo, preferred_element_type=jnp.float32) + bo


def _cross_attn_block(x_enc, y_dec, wkv, bkv, wq, bq, wo, bo, mask,
                      num_heads, head_dim):
    """Cross attention; kv layout matches torch reshape(..., H, 2*hd)."""
    kv = jnp.dot(x_enc, wkv, preferred_element_type=jnp.float32) + bkv
    q = jnp.dot(y_dec, wq, preferred_element_type=jnp.float32) + bq
    scale = 1.0 / math.sqrt(head_dim)
    outs = []
    for h in range(num_heads):                                       # [k|v] per head
        kb = 2 * head_dim * h
        k = kv[:, kb:kb + head_dim]
        v = kv[:, kb + head_dim:kb + 2 * head_dim]
        qh = q[:, h * head_dim:(h + 1) * head_dim]
        outs.append(_attention_core(qh, k, v, mask, scale))
    vals = jnp.concatenate(outs, axis=-1)
    return jnp.dot(vals, wo, preferred_element_type=jnp.float32) + bo


# ---------------------------------------------------------------------------
# kernels
# ---------------------------------------------------------------------------

def _embedding_kernel(ids_ref, emb_ref, pe_ref, bits_ref, out_ref, *,
                      seq_len, keep_thr, inv_keep):
    """Token embedding gather + positional encoding + dropout, one sentence/step."""
    b = pl.program_id(0)
    # Row gather from the VMEM-resident table (no one-hot, no MXU work).
    rows = [emb_ref[pl.ds(ids_ref[b * seq_len + s], 1), :] for s in range(seq_len)]
    emb = jnp.concatenate(rows, axis=0)                              # (S, D)
    x = emb + pe_ref[...]                                            # hoisted PE tile
    out_ref[0] = _dropout(x, bits_ref[0], keep_thr, inv_keep)


def _encoder_layer_kernel(x_ref, mask_ref, bits_attn_ref, bits_ffn_ref, bits_out_ref,
                          wqkv_ref, bqkv_ref, wo_ref, bo_ref,
                          g1_ref, be1_ref,
                          w1_ref, b1_ref, w2_ref, b2_ref,
                          g2_ref, be2_ref,
                          out_ref, *, num_heads, head_dim, keep_thr, inv_keep, eps):
    """Fused EncoderLayer: MHA -> drop+add+LN -> FFN(drop) -> drop+add+LN."""
    x = x_ref[0]                                                     # (S, D)
    mask = mask_ref[...]

    attn = _mha_block(x, wqkv_ref[...], bqkv_ref[...], wo_ref[...], bo_ref[...],
                      mask, num_heads, head_dim)
    y = _dropout(attn, bits_attn_ref[0], keep_thr, inv_keep) + x
    y = _layernorm(y, g1_ref[...], be1_ref[...], eps)

    h = jnp.dot(y, w1_ref[...], preferred_element_type=jnp.float32) + b1_ref[...]
    h = jnp.maximum(h, 0.0)
    h = _dropout(h, bits_ffn_ref[0], keep_thr, inv_keep)
    f = jnp.dot(h, w2_ref[...], preferred_element_type=jnp.float32) + b2_ref[...]

    z = _dropout(f, bits_out_ref[0], keep_thr, inv_keep) + y
    out_ref[0] = _layernorm(z, g2_ref[...], be2_ref[...], eps)


def _decoder_layer_kernel(enc_ref, y_ref, self_mask_ref, cross_mask_ref,
                          bits_sa_ref, bits_ca_ref, bits_ffn_ref, bits_out_ref,
                          wqkv_ref, bqkv_ref, wo1_ref, bo1_ref,
                          g1_ref, be1_ref,
                          wkv_ref, bkv_ref, wq_ref, bq_ref, wo2_ref, bo2_ref,
                          g2_ref, be2_ref,
                          w1_ref, b1_ref, w2_ref, b2_ref,
                          g3_ref, be3_ref,
                          out_ref, *, num_heads, head_dim, keep_thr, inv_keep, eps):
    """Fused DecoderLayer: self-attn, cross-attn, FFN with residual+LN blocks."""
    enc = enc_ref[0]                                                 # encoder output (S, D)
    y = y_ref[0]                                                     # decoder state  (S, D)
    self_mask = self_mask_ref[...]
    cross_mask = cross_mask_ref[...]

    sa = _mha_block(y, wqkv_ref[...], bqkv_ref[...], wo1_ref[...], bo1_ref[...],
                    self_mask, num_heads, head_dim)
    y = _dropout(sa, bits_sa_ref[0], keep_thr, inv_keep) + y
    y = _layernorm(y, g1_ref[...], be1_ref[...], eps)

    ca = _cross_attn_block(enc, y, wkv_ref[...], bkv_ref[...], wq_ref[...], bq_ref[...],
                           wo2_ref[...], bo2_ref[...], cross_mask, num_heads, head_dim)
    y = _dropout(ca, bits_ca_ref[0], keep_thr, inv_keep) + y
    y = _layernorm(y, g2_ref[...], be2_ref[...], eps)

    h = jnp.dot(y, w1_ref[...], preferred_element_type=jnp.float32) + b1_ref[...]
    h = jnp.maximum(h, 0.0)
    h = _dropout(h, bits_ffn_ref[0], keep_thr, inv_keep)
    f = jnp.dot(h, w2_ref[...], preferred_element_type=jnp.float32) + b2_ref[...]

    z = _dropout(f, bits_out_ref[0], keep_thr, inv_keep) + y
    out_ref[0] = _layernorm(z, g3_ref[...], be3_ref[...], eps)


def _linear_kernel(x_ref, w_ref, b_ref, out_ref):
    out_ref[0] = jnp.dot(x_ref[0], w_ref[...], preferred_element_type=jnp.float32) + b_ref[...]


# ---------------------------------------------------------------------------
# kernel wrappers
# ---------------------------------------------------------------------------

def sentence_embedding_forward(ids, emb_table, pe, rng, *, drop_p):
    """ids (B, S) int32, emb_table (V, D) f32, pe (S, D) f32 -> (B, S, D) f32."""
    B, S = ids.shape
    V, D = emb_table.shape
    keep_thr, inv_keep = _dropout_consts(drop_p)
    ids_flat = jnp.clip(ids.reshape(-1), 0, V - 1).astype(jnp.int32)  # validate ids
    bits = jax.random.bits(rng, (B, S, D), dtype=jnp.uint32)

    kernel = functools.partial(_embedding_kernel, seq_len=S,
                               keep_thr=keep_thr, inv_keep=inv_keep)
    grid_spec = pltpu.PrefetchScalarGridSpec(
        num_scalar_prefetch=1,                  # token ids live in SMEM
        grid=(B,),
        in_specs=[
            pl.BlockSpec((V, D), lambda b, ids_ref: (0, 0)),          # table (VMEM-resident)
            pl.BlockSpec((S, D), lambda b, ids_ref: (0, 0)),          # hoisted PE tile
            pl.BlockSpec((1, S, D), lambda b, ids_ref: (b, 0, 0)),    # dropout bits
        ],
        out_specs=pl.BlockSpec((1, S, D), lambda b, ids_ref: (b, 0, 0)),
    )
    return pl.pallas_call(
        kernel,
        out_shape=jax.ShapeDtypeStruct((B, S, D), jnp.float32),
        grid_spec=grid_spec,
        compiler_params=pltpu.CompilerParams(
            dimension_semantics=("parallel",)),
    )(ids_flat, emb_table, pe, bits)


def encoder_layer_forward(x, lp, mask, rng, drop_p, num_heads, head_dim, eps=1e-5):
    B, S, D = x.shape
    H = lp["ffn"]["w1"].shape[1]
    keep_thr, inv_keep = _dropout_consts(drop_p)
    k1, k2, k3 = jax.random.split(rng, 3)
    bits_attn = jax.random.bits(k1, (B, S, D), dtype=jnp.uint32)
    bits_ffn = jax.random.bits(k2, (B, S, H), dtype=jnp.uint32)
    bits_out = jax.random.bits(k3, (B, S, D), dtype=jnp.uint32)

    a, f, ln1, ln2 = lp["attn"], lp["ffn"], lp["ln1"], lp["ln2"]
    kernel = functools.partial(_encoder_layer_kernel, num_heads=num_heads,
                               head_dim=head_dim, keep_thr=keep_thr,
                               inv_keep=inv_keep, eps=eps)
    args = [x, mask, bits_attn, bits_ffn, bits_out,
            a["wqkv"], a["bqkv"], a["wo"], a["bo"],
            ln1["gamma"], ln1["beta"],
            f["w1"], f["b1"], f["w2"], f["b2"],
            ln2["gamma"], ln2["beta"]]
    flags = [True, False, True, True, True] + [False] * 12
    return _run_batched_kernel(kernel, args, flags,
                               jax.ShapeDtypeStruct((B, S, D), jnp.float32))


def decoder_layer_forward(enc, y, lp, self_mask, cross_mask, rng, drop_p,
                          num_heads, head_dim, eps=1e-5):
    B, S, D = y.shape
    H = lp["ffn"]["w1"].shape[1]
    keep_thr, inv_keep = _dropout_consts(drop_p)
    k1, k2, k3, k4 = jax.random.split(rng, 4)
    bits_sa = jax.random.bits(k1, (B, S, D), dtype=jnp.uint32)
    bits_ca = jax.random.bits(k2, (B, S, D), dtype=jnp.uint32)
    bits_ffn = jax.random.bits(k3, (B, S, H), dtype=jnp.uint32)
    bits_out = jax.random.bits(k4, (B, S, D), dtype=jnp.uint32)

    sa, ca, f = lp["self_attn"], lp["cross_attn"], lp["ffn"]
    ln1, ln2, ln3 = lp["ln1"], lp["ln2"], lp["ln3"]
    kernel = functools.partial(_decoder_layer_kernel, num_heads=num_heads,
                               head_dim=head_dim, keep_thr=keep_thr,
                               inv_keep=inv_keep, eps=eps)
    args = [enc, y, self_mask, cross_mask, bits_sa, bits_ca, bits_ffn, bits_out,
            sa["wqkv"], sa["bqkv"], sa["wo"], sa["bo"],
            ln1["gamma"], ln1["beta"],
            ca["wkv"], ca["bkv"], ca["wq"], ca["bq"], ca["wo"], ca["bo"],
            ln2["gamma"], ln2["beta"],
            f["w1"], f["b1"], f["w2"], f["b2"],
            ln3["gamma"], ln3["beta"]]
    flags = [True, True, False, False, True, True, True, True] + [False] * 20
    return _run_batched_kernel(kernel, args, flags,
                               jax.ShapeDtypeStruct((B, S, D), jnp.float32))


def linear_forward(x, w, b):
    B, S, D = x.shape
    V = w.shape[1]
    return _run_batched_kernel(_linear_kernel, [x, w, b], [True, False, False],
                               jax.ShapeDtypeStruct((B, S, V), jnp.float32))


# ---------------------------------------------------------------------------
# model (parameters + tokenization + forward orchestration)
# ---------------------------------------------------------------------------

def _init_linear(key, fan_in, fan_out):
    kw, kb = jax.random.split(key)
    bound = 1.0 / math.sqrt(fan_in)
    w = jax.random.uniform(kw, (fan_in, fan_out), jnp.float32, -bound, bound)
    b = jax.random.uniform(kb, (1, fan_out), jnp.float32, -bound, bound)
    return w, b


class Transformer:
    """JAX/Pallas port of the PyTorch Transformer (encoder-decoder) module."""

    def __init__(self, d_model, ffn_hidden, num_heads, drop_prob, num_layers,
                 max_sequence_length, kn_vocab_size, english_to_index,
                 korean_to_index, START_TOKEN, END_TOKEN, PADDING_TOKEN, *, key):
        assert d_model % num_heads == 0
        self.d_model = d_model
        self.ffn_hidden = ffn_hidden
        self.num_heads = num_heads
        self.head_dim = d_model // num_heads
        self.drop_prob = drop_prob
        self.num_layers = num_layers
        self.max_sequence_length = max_sequence_length
        self.english_to_index = english_to_index
        self.korean_to_index = korean_to_index
        self.START_TOKEN = START_TOKEN
        self.END_TOKEN = END_TOKEN
        self.PADDING_TOKEN = PADDING_TOKEN

        keys = iter(jax.random.split(key, 8 + 12 * num_layers))

        self.enc_embedding = jax.random.normal(
            next(keys), (len(english_to_index), d_model), jnp.float32)
        self.dec_embedding = jax.random.normal(
            next(keys), (len(korean_to_index), d_model), jnp.float32)
        self.pe = sinusoidal_positional_encoding(max_sequence_length, d_model)

        def mha_params():
            wqkv, bqkv = _init_linear(next(keys), d_model, 3 * d_model)
            wo, bo = _init_linear(next(keys), d_model, d_model)
            return dict(wqkv=wqkv, bqkv=bqkv, wo=wo, bo=bo)

        def xattn_params():
            wkv, bkv = _init_linear(next(keys), d_model, 2 * d_model)
            wq, bq = _init_linear(next(keys), d_model, d_model)
            wo, bo = _init_linear(next(keys), d_model, d_model)
            return dict(wkv=wkv, bkv=bkv, wq=wq, bq=bq, wo=wo, bo=bo)

        def ffn_params():
            w1, b1 = _init_linear(next(keys), d_model, ffn_hidden)
            w2, b2 = _init_linear(next(keys), ffn_hidden, d_model)
            return dict(w1=w1, b1=b1, w2=w2, b2=b2)

        def ln_params():
            return dict(gamma=jnp.ones((1, d_model), jnp.float32),
                        beta=jnp.zeros((1, d_model), jnp.float32))

        self.encoder_layers = [dict(attn=mha_params(), ln1=ln_params(),
                                    ffn=ffn_params(), ln2=ln_params())
                               for _ in range(num_layers)]
        self.decoder_layers = [dict(self_attn=mha_params(), ln1=ln_params(),
                                    cross_attn=xattn_params(), ln2=ln_params(),
                                    ffn=ffn_params(), ln3=ln_params())
                               for _ in range(num_layers)]
        self.w_out, self.b_out = _init_linear(next(keys), d_model, kn_vocab_size)

    # ------------------------------------------------------------------ utils
    def _tokenize(self, batch, language_to_index, start_token, end_token):
        def tok(sentence):
            idx = [language_to_index[t] for t in list(sentence)]
            if start_token:
                idx.insert(0, language_to_index[self.START_TOKEN])
            if end_token:
                idx.append(language_to_index[self.END_TOKEN])
            while len(idx) < self.max_sequence_length:
                idx.append(language_to_index[self.PADDING_TOKEN])
            return idx[:self.max_sequence_length]
        return jnp.asarray([tok(s) for s in batch], dtype=jnp.int32)

    def _as_mask(self, mask):
        S = self.max_sequence_length
        if mask is None:
            return jnp.zeros((S, S), jnp.float32)
        return jnp.asarray(mask, jnp.float32).reshape(S, S)

    # ---------------------------------------------------------------- forward
    def forward(self, x, y, encoder_self_attention_mask=None,
                decoder_self_attention_mask=None, decoder_cross_attention_mask=None,
                enc_start_token=False, enc_end_token=False,
                dec_start_token=False, dec_end_token=False,
                rng=None, training=True):
        if rng is None:
            rng = jax.random.PRNGKey(0)
        p_emb = 0.1 if training else 0.0          # SentenceEmbedding uses p=0.1
        p_layer = self.drop_prob if training else 0.0

        enc_mask = self._as_mask(encoder_self_attention_mask)
        dec_self_mask = self._as_mask(decoder_self_attention_mask)
        dec_cross_mask = self._as_mask(decoder_cross_attention_mask)

        x_ids = self._tokenize(x, self.english_to_index, enc_start_token, enc_end_token)
        y_ids = self._tokenize(y, self.korean_to_index, dec_start_token, dec_end_token)

        keys = iter(jax.random.split(rng, 2 + 2 * self.num_layers))

        # ------------------------------- encoder -------------------------------
        h = sentence_embedding_forward(x_ids, self.enc_embedding, self.pe,
                                       next(keys), drop_p=p_emb)
        for lp in self.encoder_layers:
            h = encoder_layer_forward(h, lp, enc_mask, next(keys), p_layer,
                                      self.num_heads, self.head_dim)
        enc_out = h

        # ------------------------------- decoder -------------------------------
        g = sentence_embedding_forward(y_ids, self.dec_embedding, self.pe,
                                       next(keys), drop_p=p_emb)
        for lp in self.decoder_layers:
            g = decoder_layer_forward(enc_out, g, lp, dec_self_mask, dec_cross_mask,
                                      next(keys), p_layer,
                                      self.num_heads, self.head_dim)

        # ------------------------------ final proj -----------------------------
        return linear_forward(g, self.w_out, self.b_out)


# ---------------------------------------------------------------------------
# demo
# ---------------------------------------------------------------------------

if __name__ == "__main__":
    START_TOKEN, END_TOKEN, PADDING_TOKEN = "<START>", "<END>", "<PAD>"
    english_chars = list("abcdefghijklmnopqrstuvwxyz ") + [START_TOKEN, END_TOKEN, PADDING_TOKEN]
    korean_chars = list("가나다라마바사아자차카타파하 ") + [START_TOKEN, END_TOKEN, PADDING_TOKEN]
    english_to_index = {c: i for i, c in enumerate(english_chars)}
    korean_to_index = {c: i for i, c in enumerate(korean_chars)}

    d_model = 32
    ffn_hidden = 64
    num_heads = 4
    drop_prob = 0.1
    num_layers = 1
    max_sequence_length = 8
    kn_vocab_size = len(korean_to_index)

    key = jax.random.PRNGKey(0)
    model = Transformer(d_model, ffn_hidden, num_heads, drop_prob, num_layers,
                        max_sequence_length, kn_vocab_size,
                        english_to_index, korean_to_index,
                        START_TOKEN, END_TOKEN, PADDING_TOKEN, key=key)

    x_batch = ["hello", "how are"]     # English (character-level tokens)
    y_batch = ["가나다", "라마바사"]    # Korean  (character-level tokens)

    out = model.forward(x_batch, y_batch,
                        enc_start_token=False, enc_end_token=False,
                        dec_start_token=True, dec_end_token=True,
                        rng=jax.random.PRNGKey(42), training=True)
    out = jax.block_until_ready(out)

    assert out.shape == (2, max_sequence_length, kn_vocab_size), out.shape
    assert out.dtype == jnp.float32
    assert bool(jnp.all(jnp.isfinite(out)))
    print("KERNEL_OK")
</pallas_src>

<mosaic_0001>
module attributes {stable_mosaic.version = 11 : i64} {
  func.func @_embedding_kernel(%arg0: i32, %arg1: memref<16xi32, #tpu.memory_space<smem>>, %arg2: memref<30x32xf32, #tpu.memory_space<vmem>>, %arg3: memref<8x32xf32, #tpu.memory_space<vmem>>, %arg4: memref<1x8x32xi32, #tpu.memory_space<vmem>>, %arg5: memref<1x8x32xf32, #tpu.memory_space<vmem>>) attributes {dimension_semantics = [#tpu.dimension_semantics<parallel>], iteration_bounds = array<i64: 2>, scalar_prefetch = 1 : i64, scratch_operands = 0 : i64, tpu.core_type = #tpu.core_type<tc>, window_params = [{pipeline_mode = #tpu.pipeline_mode<synchronous>, transform_indices = @transform_0, window_bounds = array<i64: 30, 32>}, {pipeline_mode = #tpu.pipeline_mode<synchronous>, transform_indices = @transform_1, window_bounds = array<i64: 8, 32>}, {transform_indices = @transform_2, window_bounds = array<i64: 1, 8, 32>}, {transform_indices = @transform_3, window_bounds = array<i64: 1, 8, 32>}]} {
    %c8_i32 = arith.constant 8 : i32
    %0 = arith.muli %arg0, %c8_i32 : i32
    %c0_i32 = arith.constant 0 : i32
    %1 = arith.addi %0, %c0_i32 : i32
    %2 = arith.index_cast %1 : i32 to index
    %3 = memref.load %arg1[%2] : memref<16xi32, #tpu.memory_space<smem>>
    %4 = arith.index_cast %3 : i32 to index
    %c0 = arith.constant 0 : index
    %5 = vector.load %arg2[%4, %c0] : memref<30x32xf32, #tpu.memory_space<vmem>>, vector<1x32xf32>
    %c8_i32_0 = arith.constant 8 : i32
    %6 = arith.muli %arg0, %c8_i32_0 : i32
    %c1_i32 = arith.constant 1 : i32
    %7 = arith.addi %6, %c1_i32 : i32
    %8 = arith.index_cast %7 : i32 to index
    %9 = memref.load %arg1[%8] : memref<16xi32, #tpu.memory_space<smem>>
    %10 = arith.index_cast %9 : i32 to index
    %c0_1 = arith.constant 0 : index
    %11 = vector.load %arg2[%10, %c0_1] : memref<30x32xf32, #tpu.memory_space<vmem>>, vector<1x32xf32>
    %c8_i32_2 = arith.constant 8 : i32
    %12 = arith.muli %arg0, %c8_i32_2 : i32
    %c2_i32 = arith.constant 2 : i32
    %13 = arith.addi %12, %c2_i32 : i32
    %14 = arith.index_cast %13 : i32 to index
    %15 = memref.load %arg1[%14] : memref<16xi32, #tpu.memory_space<smem>>
    %16 = arith.index_cast %15 : i32 to index
    %c0_3 = arith.constant 0 : index
    %17 = vector.load %arg2[%16, %c0_3] : memref<30x32xf32, #tpu.memory_space<vmem>>, vector<1x32xf32>
    %c8_i32_4 = arith.constant 8 : i32
    %18 = arith.muli %arg0, %c8_i32_4 : i32
    %c3_i32 = arith.constant 3 : i32
    %19 = arith.addi %18, %c3_i32 : i32
    %20 = arith.index_cast %19 : i32 to index
    %21 = memref.load %arg1[%20] : memref<16xi32, #tpu.memory_space<smem>>
    %22 = arith.index_cast %21 : i32 to index
    %c0_5 = arith.constant 0 : index
    %23 = vector.load %arg2[%22, %c0_5] : memref<30x32xf32, #tpu.memory_space<vmem>>, vector<1x32xf32>
    %c8_i32_6 = arith.constant 8 : i32
    %24 = arith.muli %arg0, %c8_i32_6 : i32
    %c4_i32 = arith.constant 4 : i32
    %25 = arith.addi %24, %c4_i32 : i32
    %26 = arith.index_cast %25 : i32 to index
    %27 = memref.load %arg1[%26] : memref<16xi32, #tpu.memory_space<smem>>
    %28 = arith.index_cast %27 : i32 to index
    %c0_7 = arith.constant 0 : index
    %29 = vector.load %arg2[%28, %c0_7] : memref<30x32xf32, #tpu.memory_space<vmem>>, vector<1x32xf32>
    %c8_i32_8 = arith.constant 8 : i32
    %30 = arith.muli %arg0, %c8_i32_8 : i32
    %c5_i32 = arith.constant 5 : i32
    %31 = arith.addi %30, %c5_i32 : i32
    %32 = arith.index_cast %31 : i32 to index
    %33 = memref.load %arg1[%32] : memref<16xi32, #tpu.memory_space<smem>>
    %34 = arith.index_cast %33 : i32 to index
    %c0_9 = arith.constant 0 : index
    %35 = vector.load %arg2[%34, %c0_9] : memref<30x32xf32, #tpu.memory_space<vmem>>, vector<1x32xf32>
    %c8_i32_10 = arith.constant 8 : i32
    %36 = arith.muli %arg0, %c8_i32_10 : i32
    %c6_i32 = arith.constant 6 : i32
    %37 = arith.addi %36, %c6_i32 : i32
    %38 = arith.index_cast %37 : i32 to index
    %39 = memref.load %arg1[%38] : memref<16xi32, #tpu.memory_space<smem>>
    %40 = arith.index_cast %39 : i32 to index
    %c0_11 = arith.constant 0 : index
    %41 = vector.load %arg2[%40, %c0_11] : memref<30x32xf32, #tpu.memory_space<vmem>>, vector<1x32xf32>
    %c8_i32_12 = arith.constant 8 : i32
    %42 = arith.muli %arg0, %c8_i32_12 : i32
    %c7_i32 = arith.constant 7 : i32
    %43 = arith.addi %42, %c7_i32 : i32
    %44 = arith.index_cast %43 : i32 to index
    %45 = memref.load %arg1[%44] : memref<16xi32, #tpu.memory_space<smem>>
    %46 = arith.index_cast %45 : i32 to index
    %c0_13 = arith.constant 0 : index
    %47 = vector.load %arg2[%46, %c0_13] : memref<30x32xf32, #tpu.memory_space<vmem>>, vector<1x32xf32>
    %48 = tpu.concatenate %5, %11, %17, %23, %29, %35, %41, %47 in 0 : vector<1x32xf32>, vector<1x32xf32>, vector<1x32xf32>, vector<1x32xf32>, vector<1x32xf32>, vector<1x32xf32>, vector<1x32xf32>, vector<1x32xf32> -> vector<8x32xf32>
    %c0_14 = arith.constant 0 : index
    %c0_15 = arith.constant 0 : index
    %49 = vector.load %arg3[%c0_14, %c0_15] : memref<8x32xf32, #tpu.memory_space<vmem>>, vector<8x32xf32>
    %50 = arith.addf %48, %49 : vector<8x32xf32>
    %c0_16 = arith.constant 0 : index
    %c0_17 = arith.constant 0 : index
    %c0_18 = arith.constant 0 : index
    %51 = vector.load %arg4[%c0_16, %c0_17, %c0_18] : memref<1x8x32xi32, #tpu.memory_space<vmem>>, vector<1x8x32xi32>
    %52 = vector.shape_cast %51 : vector<1x8x32xi32> to vector<8x32xi32>
    %c429496730_i32 = arith.constant 429496730 : i32
    %53 = vector.broadcast %c429496730_i32 : i32 to vector<8x32xi32>
    %54 = arith.cmpi uge, %52, %53 : vector<8x32xi32>
    %cst = arith.constant 1.11111116 : f32
    %55 = vector.broadcast %cst : f32 to vector<8x32xf32>
    %56 = arith.mulf %50, %55 : vector<8x32xf32>
    %cst_19 = arith.constant 0.000000e+00 : f32
    %57 = vector.broadcast %cst_19 : f32 to vector<8x32xf32>
    %58 = arith.select %54, %56, %57 : vector<8x32xi1>, vector<8x32xf32>
    %c0_20 = arith.constant 0 : index
    %c0_21 = arith.constant 0 : index
    %c0_22 = arith.constant 0 : index
    %59 = vector.load %arg5[%c0_20, %c0_21, %c0_22] : memref<1x8x32xf32, #tpu.memory_space<vmem>>, vector<1x8x32xf32>
    %60 = vector.shape_cast %59 : vector<1x8x32xf32> to vector<8x32xf32>
    %61 = vector.shape_cast %58 : vector<8x32xf32> to vector<1x8x32xf32>
    tpu.vector_store %arg5[%c0_20, %c0_21, %c0_22], %61 {strides = array<i32>} : memref<1x8x32xf32, #tpu.memory_space<vmem>>, vector<1x8x32xf32>,
    return
  }
  func.func @transform_0(%arg0: i32, %arg1: memref<16xi32, #tpu.memory_space<smem>>) -> (i32, i32) {
    %c0_i32 = arith.constant 0 : i32
    %c0_i32_0 = arith.constant 0 : i32
    %c0_i32_1 = arith.constant 0 : i32
    return %c0_i32, %c0_i32_0 : i32, i32
  }
  func.func @transform_1(%arg0: i32, %arg1: memref<16xi32, #tpu.memory_space<smem>>) -> (i32, i32) {
    %c0_i32 = arith.constant 0 : i32
    %c0_i32_0 = arith.constant 0 : i32
    %c0_i32_1 = arith.constant 0 : i32
    return %c0_i32, %c0_i32_0 : i32, i32
  }
  func.func @transform_2(%arg0: i32, %arg1: memref<16xi32, #tpu.memory_space<smem>>) -> (i32, i32, i32) {
    %c0_i32 = arith.constant 0 : i32
    %c0_i32_0 = arith.constant 0 : i32
    %c0_i32_1 = arith.constant 0 : i32
    return %arg0, %c0_i32, %c0_i32_0 : i32, i32, i32
  }
  func.func @transform_3(%arg0: i32, %arg1: memref<16xi32, #tpu.memory_space<smem>>) -> (i32, i32, i32) {
    %c0_i32 = arith.constant 0 : i32
    %c0_i32_0 = arith.constant 0 : i32
    %c0_i32_1 = arith.constant 0 : i32
    return %arg0, %c0_i32, %c0_i32_0 : i32, i32, i32
  }
}

</mosaic_0001>

<llo_original>
// kernel: tpu_custom_call.1
$region0: #{tpu_custom_call.1}
  #allocation0 [shape = 'u32[]', space=smem, size = 0x4, offset = 0x4, fixed_abs, tag = 'smem constant byte address 0x4 - core index']
  #allocation1 [shape = 'u32[144,128]{1,0:T(1,128)}', space=vmem, size = 0x12000, scoped, tag = 'internal scratch']
  #allocation2 [shape = 's32[1]{0}', space=sflag, size = 0x4, scoped, tag = 'scoped memory for tpu_custom_call.1']
  #allocation3 [shape = 'u8[512]{0}', space=smem, size = 0x200, scoped, tag = 'prefetched SMEM operand 0']
  %s0 = inlined_call_operand.hbm [shape: s32[16], index: 0, kind: input, shape index: {}]
  %s1 = inlined_call_operand.hbm [shape: f32[30,32], index: 1, kind: input, shape index: {}]
  %s2 = inlined_call_operand.hbm [shape: f32[8,32], index: 2, kind: input, shape index: {}]
  %s3 = inlined_call_operand.hbm [shape: u32[2,8,32], index: 3, kind: input, shape index: {}]
  %s4 = inlined_call_operand.hbm [shape: f32[2,8,32], index: 4, kind: output, shape index: {}]
  %s5 = sld [smem:[#allocation0]]
  $region57: #{tpu_custom_call.1} parent=0
    _
  %s7 = ssub.s32 1, %s5
  %s8 = scalar_select 0, %s7, %s5
  %10 = dma.hbm_to_smem %s0, 16, [#allocation3], [#allocation2]
  %11 = dma.done [#allocation2], 16
  %12 = sfence
  $region1: #{tpu_custom_call.1} parent=0
    #allocation4 [shape = 'u8[16384]{0}', space=vmem, size = 0x4000, scoped, tag = 'input window, operand 1, single buffered']
    #allocation5 [shape = 's32[2]{0}', space=sflag, size = 0x8, scoped, tag = 'scoped memory for tpu_custom_call.1']
    #allocation6 [shape = 's32[2]{0}', space=sflag, size = 0x8, scoped, tag = 'scoped memory for tpu_custom_call.1']
    #allocation7 [shape = 'u8[4096]{0}', space=vmem, size = 0x1000, scoped, tag = 'input window, operand 2, single buffered']
    #allocation8 [shape = 's32[1]{0}', space=sflag, size = 0x4, scoped, tag = 'scoped memory for tpu_custom_call.1']
    #allocation9 [shape = 'u8[8192]{0}', space=vmem, size = 0x2000, scoped, tag = 'input window, operand 3']
    #allocation10 [shape = 'u8[8192]{0}', space=vmem, size = 0x2000, scoped, tag = 'output window, operand 0']
    %13 = vsyncpa [#allocation5], 0
    %14 = vsyncpa [#allocation8], 0
    %15 = vsyncpa [#allocation6], 0
    %s16 = scalar_lea.sflag [#allocation6], 1
    %17 = vsyncpa %s16, 0
    loop: start=0, step=1, limit=4
    $region2: #{tpu_custom_call.1} parent=1 // loop_pre_header
      _
    $region3: #{tpu_custom_call.1} parent=1 // loop_header
      %s19 = sphi 0, %s23
      %p20 = scmp.ge.s32.totalorder %s19, 4
      %s27 = sphi 0, %s27
      %s29 = sphi 0, %s27
      %s30 = sphi 0, %s29
      %s44 = sphi 0, %s30
      %s48 = sphi 0, %s48
      %s50 = sphi 0, %s48
      %s51 = sphi 0, %s50
      %s65 = sphi 0, %s51
      %s71 = sphi 0, %s73
      %s74 = sphi 0, %s71
      %s75 = sphi 0, %s74
      %s91 = sphi 0, %s75
      %s97 = sphi 0, %s99
      %s100 = sphi 0, %s97
      %s101 = sphi 0, %s100
      %s117 = sphi 0, %s101
    $region4: #{tpu_custom_call.1} parent=1 // loop_header_branch
      %22 = sbr.rel (%p20) target = $region8
    $region5: #{tpu_custom_call.1} parent=1 // loop_body
      %s24 = ssub.s32 %s19, 1
      %s25 = ssub.s32 %s19, 2
      %s26 = sadd.s32 %s19, 1
      %s28 = sadd.s32 %s27, 1
      %p31 = scmp.eq.s32.totalorder %s19, 1
      %p32 = scmp.ne.s32.totalorder %s27, %s29
      %p33 = scmp.eq.s32.totalorder %s19, 0
      %p34 = por %p32, %p33
      %p35 = scmp.ne.s32.totalorder %s27, %s29
      %p36 = scmp.eq.s32.totalorder %s24, 1
      %p37 = por %p35, %p36
      %p38 = scmp.ne.s32.totalorder %s29, %s30
      %p39 = scmp.eq.s32.totalorder %s24, 0
      %p40 = por %p38, %p39
      %p41 = scmp.ne.s32.totalorder %s29, %s30
      %p42 = scmp.eq.s32.totalorder %s25, 1
      %p43 = por %p41, %p42
      %p45 = scmp.ne.s32.totalorder %s30, %s44
      %p46 = scmp.eq.s32.totalorder %s25, 0
      %p47 = por %p45, %p46
      %s49 = sadd.s32 %s48, 1
      %p52 = scmp.eq.s32.totalorder %s19, 1
      %p53 = scmp.ne.s32.totalorder %s48, %s50
      %p54 = scmp.eq.s32.totalorder %s19, 0
      %p55 = por %p53, %p54
      %p56 = scmp.ne.s32.totalorder %s48, %s50
      %p57 = scmp.eq.s32.totalorder %s24, 1
      %p58 = por %p56, %p57
      %p59 = scmp.ne.s32.totalorder %s50, %s51
      %p60 = scmp.eq.s32.totalorder %s24, 0
      %p61 = por %p59, %p60
      %p62 = scmp.ne.s32.totalorder %s50, %s51
      %p63 = scmp.eq.s32.totalorder %s25, 1
      %p64 = por %p62, %p63
      %p66 = scmp.ne.s32.totalorder %s51, %s65
      %p67 = scmp.eq.s32.totalorder %s25, 0
      %p68 = por %p66, %p67
      %s69 = ssub.s32 %s19, %s26
      %p70 = scmp.eq.s32.totalorder %s69, 0
      %s72 = sadd.s32 %s71, 1
      %s73 = scalar_select %p70, %s71, %s72
      %p76 = pneg %p70
      %p77 = scmp.eq.s32.totalorder %s19, 1
      %p78 = por %p76, %p77
      %p79 = scmp.ne.s32.totalorder %s71, %s74
      %p80 = scmp.eq.s32.totalorder %s19, 0
      %p81 = por %p79, %p80
      %p82 = scmp.ne.s32.totalorder %s71, %s74
      %p83 = scmp.eq.s32.totalorder %s24, 1
      %p84 = por %p82, %p83
      %p85 = scmp.ne.s32.totalorder %s74, %s75
      %p86 = scmp.eq.s32.totalorder %s24, 0
      %p87 = por %p85, %p86
      %p88 = scmp.ne.s32.totalorder %s74, %s75
      %p89 = scmp.eq.s32.totalorder %s25, 1
      %p90 = por %p88, %p89
      %p92 = scmp.ne.s32.totalorder %s75, %s91
      %p93 = scmp.eq.s32.totalorder %s25, 0
      %p94 = por %p92, %p93
      %s95 = ssub.s32 %s19, %s26
      %p96 = scmp.eq.s32.totalorder %s95, 0
      %s98 = sadd.s32 %s97, 1
      %s99 = scalar_select %p96, %s97, %s98
      %p102 = pneg %p96
      %p103 = scmp.eq.s32.totalorder %s19, 1
      %p104 = por %p102, %p103
      %p105 = scmp.ne.s32.totalorder %s97, %s100
      %p106 = scmp.eq.s32.totalorder %s19, 0
      %p107 = por %p105, %p106
      %p108 = scmp.ne.s32.totalorder %s97, %s100
      %p109 = scmp.eq.s32.totalorder %s24, 1
      %p110 = por %p108, %p109
      %p111 = scmp.ne.s32.totalorder %s100, %s101
      %p112 = scmp.eq.s32.totalorder %s24, 0
      %p113 = por %p111, %p112
      %p114 = scmp.ne.s32.totalorder %s100, %s101
      %p115 = scmp.eq.s32.totalorder %s25, 1
      %p116 = por %p114, %p115
      %p118 = scmp.ne.s32.totalorder %s101, %s117
      %p119 = scmp.eq.s32.totalorder %s25, 0
      %p120 = por %p118, %p119
      %p121 = scmp.le.s32.totalorder 1, %s19
      %p122 = scmp.lt.s32.totalorder %s19, 3
      %p123 = pnand %p121, %p122
      %p124 = pneg %p123
      // Predicated region
      $region9: #{tpu_custom_call.1} parent=5 // pred_check
        _
      $region10: #{tpu_custom_call.1} parent=5 // pred_check_branch
        %126 = sbr.rel (%p123) target = $region12
      $region11: #{tpu_custom_call.1} parent=5 // pred_region
        %s127 = ssub.s32 %s19, 1
        // Predicated region
        $region13: #{tpu_custom_call.1} parent=11 // pred_check
          %p128 = pneg %p40
        $region14: #{tpu_custom_call.1} parent=11 // pred_check_branch
          %130 = sbr.rel (%p128) target = $region16
        $region15: #{tpu_custom_call.1} parent=11 // pred_region
          %s132 = ssub.s32 512, 512
          %133 = vsyncadd [#allocation5], %s132
          %s134 = sshll.u32 [#allocation4], 4
          %s135 = int_to_ptr.vmem [resolvable:$true] %s134
          %140 = dma.hbm_to_vmem [thread:$0]  %s1, 512, %s135, [#allocation5], 128, 128, 8
        $region16: #{tpu_custom_call.1} parent=11 // pred_fallthru
          _
        // Predicated region
        $region17: #{tpu_custom_call.1} parent=11 // pred_check
          %p141 = pneg %p61
        $region18: #{tpu_custom_call.1} parent=11 // pred_check_branch
          %143 = sbr.rel (%p141) target = $region20
        $region19: #{tpu_custom_call.1} parent=11 // pred_region
          %s145 = ssub.s32 128, 128
          %146 = vsyncadd [#allocation8], %s145
          %s148 = sshll.u32 [#allocation7], 4
          %s149 = int_to_ptr.vmem [resolvable:$true] %s148
          %151 = dma.hbm_to_vmem [thread:$0]  %s2, 128, %s149, [#allocation8]
        $region20: #{tpu_custom_call.1} parent=11 // pred_fallthru
          _
      $region12: #{tpu_custom_call.1} parent=5 // pred_fallthru
        _
      %p152 = scmp.lt.s32.totalorder %s19, 2
      // Predicated region
      $region21: #{tpu_custom_call.1} parent=5 // pred_check
        %p153 = pneg %p152
      $region22: #{tpu_custom_call.1} parent=5 // pred_check_branch
        %155 = sbr.rel (%p153) target = $region24
      $region23: #{tpu_custom_call.1} parent=5 // pred_region
        // Predicated region
        $region25: #{tpu_custom_call.1} parent=23 // pred_check
          %p156 = pneg %p81
        $region26: #{tpu_custom_call.1} parent=23 // pred_check_branch
          %158 = sbr.rel (%p156) target = $region28
        $region27: #{tpu_custom_call.1} parent=23 // pred_region
          %s159 = sand.u32 %s19, 1
          %s160 = scalar_lea.sflag [#allocation5], %s159
          %s161 = sand.u32 %s71, 1
          %s162 = smul.addr %s161, 8
          %s163 = scalar_lea.vmem [#allocation9], %s162
          %s165 = ssub.s32 128, 128
          %166 = vsyncadd %s160, %s165
          %s167 = smul.addr %s19, 128
          %s168 = scalar_lea.hbm %s3, %s167
          %s170 = sshll.u32 %s163, 4
          %s171 = int_to_ptr.vmem [resolvable:$true] %s170
          %173 = dma.hbm_to_vmem [thread:$0]  %s168, 128, %s171, %s160
        $region28: #{tpu_custom_call.1} parent=23 // pred_fallthru
          _
      $region24: #{tpu_custom_call.1} parent=5 // pred_fallthru
        _
      %p174 = scmp.le.s32.totalorder 1, %s19
      %p175 = scmp.lt.s32.totalorder %s19, 3
      %p176 = pnand %p174, %p175
      %p177 = pneg %p176
      // Predicated region
      $region29: #{tpu_custom_call.1} parent=5 // pred_check
        _
      $region30: #{tpu_custom_call.1} parent=5 // pred_check_branch
        %179 = sbr.rel (%p176) target = $region32
      $region31: #{tpu_custom_call.1} parent=5 // pred_region
        %s180 = ssub.s32 %s19, 1
        // Predicated region
        $region33: #{tpu_custom_call.1} parent=31 // pred_check
          %p181 = pneg %p40
        $region34: #{tpu_custom_call.1} parent=31 // pred_check_branch
          %183 = sbr.rel (%p181) target = $region36
        $region35: #{tpu_custom_call.1} parent=31 // pred_region
          %184 = dma.done [#allocation5], 512
        $region36: #{tpu_custom_call.1} parent=31 // pred_fallthru
          _
        // Predicated region
        $region37: #{tpu_custom_call.1} parent=31 // pred_check
          %p185 = pneg %p61
        $region38: #{tpu_custom_call.1} parent=31 // pred_check_branch
          %187 = sbr.rel (%p185) target = $region40
        $region39: #{tpu_custom_call.1} parent=31 // pred_region
          %188 = dma.done [#allocation8], 128
        $region40: #{tpu_custom_call.1} parent=31 // pred_fallthru
          _
        %s189 = sand.u32 %s24, 1
        %s190 = scalar_lea.sflag [#allocation5], %s189
        %s191 = sand.u32 %s74, 1
        %s192 = smul.addr %s191, 8
        %s193 = scalar_lea.vmem [#allocation9], %s192
        // Predicated region
        $region41: #{tpu_custom_call.1} parent=31 // pred_check
          %p194 = pneg %p87
        $region42: #{tpu_custom_call.1} parent=31 // pred_check_branch
          %196 = sbr.rel (%p194) target = $region44
        $region43: #{tpu_custom_call.1} parent=31 // pred_region
          %197 = dma.done %s190, 128
        $region44: #{tpu_custom_call.1} parent=31 // pred_fallthru
          _
        %p198 = pneg %p40
        %p199 = pneg %p37
        %p200 = pneg %p61
        %p201 = pneg %p58
        %s202 = sand.u32 %s24, 1
        %s203 = scalar_lea.sflag [#allocation5], %s202
        %s204 = sand.u32 %s74, 1
        %s205 = smul.addr %s204, 8
        %s206 = scalar_lea.vmem [#allocation9], %s205
        %p207 = pneg %p87
        %p208 = pneg %p84
        %p209 = pneg %p113
        %p210 = pneg %p110
        %s211 = sand.u32 %s100, 1
        %s212 = scalar_lea.sflag [#allocation6], %s211
        %s213 = sand.u32 %s100, 1
        %s214 = smul.addr %s213, 8
        %s215 = scalar_lea.vmem [#allocation10], %s214
        %s216 = smul.u32 %s24, 8
        %s217 = sld [smem:[#allocation3 + %s216]]
        %s218 = scalar_lea.vmem [#allocation4], %s217
        %v219 = vld [vmem:[%s218] sm:$0x1]
        %s220 = sadd.s32 %s216, 1
        %s221 = sld [smem:[#allocation3 + %s220]]
        %s222 = scalar_lea.vmem [#allocation4], %s221
        %v223 = vld [vmem:[%s222] sm:$0x1]
        %s224 = sadd.s32 %s216, 2
        %s225 = sld [smem:[#allocation3 + %s224]]
        %s226 = scalar_lea.vmem [#allocation4], %s225
        %v227 = vld [vmem:[%s226] sm:$0x1]
        %s228 = sadd.s32 %s216, 3
        %s229 = sld [smem:[#allocation3 + %s228]]
        %s230 = scalar_lea.vmem [#allocation4], %s229
        %v231 = vld [vmem:[%s230] sm:$0x1]
        %s232 = sadd.s32 %s216, 4
        %s233 = sld [smem:[#allocation3 + %s232]]
        %s234 = scalar_lea.vmem [#allocation4], %s233
        %v235 = vld [vmem:[%s234] sm:$0x1]
        %s236 = sadd.s32 %s216, 5
        %s237 = sld [smem:[#allocation3 + %s236]]
        %s238 = scalar_lea.vmem [#allocation4], %s237
        %v239 = vld [vmem:[%s238] sm:$0x1]
        %s240 = sadd.s32 %s216, 6
        %s241 = sld [smem:[#allocation3 + %s240]]
        %s242 = scalar_lea.vmem [#allocation4], %s241
        %v243 = vld [vmem:[%s242] sm:$0x1]
        %s244 = sadd.s32 %s216, 7
        %s245 = sld [smem:[#allocation3 + %s244]]
        %s246 = scalar_lea.vmem [#allocation4], %s245
        %v247 = vld [vmem:[%s246] sm:$0x1]
        %v249 = vrot.slane %v223, 7
        %v252 = vrot.slane %v227, 6
        %v255 = vrot.slane %v231, 5
        %v258 = vrot.slane %v235, 4
        %v261 = vrot.slane %v239, 3
        %v264 = vrot.slane %v243, 2
        %v267 = vrot.slane %v247, 1
        %vm269 = vcmask 1040384
        %v270 = vsel %vm269, %v219, %v249
        %vm271 = vcmask 1041408
        %v272 = vsel %vm271, %v270, %v252
        %vm273 = vcmask 1042432
        %v274 = vsel %vm273, %v272, %v255
        %vm275 = vcmask 1043456
        %v276 = vsel %vm275, %v274, %v258
        %vm277 = vcmask 1044480
        %v278 = vsel %vm277, %v276, %v261
        %vm279 = vcmask 1045504
        %v280 = vsel %vm279, %v278, %v264
        %vm281 = vcmask 1046528
        %v282 = vsel %vm281, %v280, %v267
        %v283 = vld [vmem:[#allocation7] sm:$0xff]
        %v284 = vadd.f32 %v282, %v283
        %v285 = vld [vmem:[%s193] sm:$0xff]
        %vm286 = vcmp.ge.u32.totalorder %v285, 429496730
        %v287 = vmul.f32 %v284, 1.1111112
        %v288 = vsel %vm286, %v287, 0.0
        %vm289 = vcmask 261120
        %290 = vst.msk [vmem:[%s215] sm:$0xff] %vm289, %v288
        %s291 = sand.u32 %s100, 1
        %s292 = scalar_lea.sflag [#allocation6], %s291
        %s293 = sand.u32 %s100, 1
        %s294 = smul.addr %s293, 8
        %s295 = scalar_lea.vmem [#allocation10], %s294
        // Predicated region
        $region45: #{tpu_custom_call.1} parent=31 // pred_check
          %p296 = pneg %p110
        $region46: #{tpu_custom_call.1} parent=31 // pred_check_branch
          %298 = sbr.rel (%p296) target = $region48
        $region47: #{tpu_custom_call.1} parent=31 // pred_region
          %s300 = ssub.s32 128, 128
          %301 = vsyncadd %s292, %s300
          %s302 = smul.addr %s24, 128
          %s303 = scalar_lea.hbm %s4, %s302
          %s305 = sshll.u32 %s295, 4
          %s306 = int_to_ptr.vmem [resolvable:$true] %s305
          %308 = dma.vmem_to_hbm [thread:$0]  %s306, 128, %s303, %s292
        $region48: #{tpu_custom_call.1} parent=31 // pred_fallthru
          _
      $region32: #{tpu_custom_call.1} parent=5 // pred_fallthru
        _
      %p309 = scmp.le.s32.totalorder 2, %s19
      // Predicated region
      $region49: #{tpu_custom_call.1} parent=5 // pred_check
        %p310 = pneg %p309
      $region50: #{tpu_custom_call.1} parent=5 // pred_check_branch
        %312 = sbr.rel (%p310) target = $region52
      $region51: #{tpu_custom_call.1} parent=5 // pred_region
        %s313 = ssub.s32 %s19, 2
        // Predicated region
        $region53: #{tpu_custom_call.1} parent=51 // pred_check
          %p314 = pneg %p116
        $region54: #{tpu_custom_call.1} parent=51 // pred_check_branch
          %316 = sbr.rel (%p314) target = $region56
        $region55: #{tpu_custom_call.1} parent=51 // pred_region
          %s317 = sand.u32 %s101, 1
          %s318 = scalar_lea.sflag [#allocation6], %s317
          %s319 = sand.u32 %s101, 1
          %s320 = smul.addr %s319, 8
          %s321 = scalar_lea.vmem [#allocation10], %s320
          %322 = dma.done %s318, 128
        $region56: #{tpu_custom_call.1} parent=51 // pred_fallthru
          _
      $region52: #{tpu_custom_call.1} parent=5 // pred_fallthru
        _
    $region6: #{tpu_custom_call.1} parent=1 // loop_footer
      %s23 = sadd.s32 1, %s19
    $region7: #{tpu_custom_call.1} parent=1 // loop_footer_branch
      %18 = sbr.rel target = $region3
    $region8: #{tpu_custom_call.1} parent=1 // loop_exit
      _
    %323 = vsyncpa [#allocation5], 1
    %s324 = scalar_lea.sflag [#allocation5], 1
    %325 = vsyncpa %s324, 1
    %326 = vsyncpa [#allocation8], 1
    %327 = vsyncpa [#allocation6], 1
    %s328 = scalar_lea.sflag [#allocation6], 1
    %329 = vsyncpa %s328, 1

</llo_original>
